<compile_context>
chip_gen: v7x
topology: tpu7x:2x2x1
jax: 0.10.0
libtpu: 0.0.40
codegen_flags: <defaults>
</compile_context>

<pallas_src>
import functools

import jax
import jax.numpy as jnp
from jax.experimental import pallas as pl
from jax.experimental.pallas import tpu as pltpu


def _leaky_relu_kernel(x_ref, o_ref, *, alpha):
    x = x_ref[...]
    o_ref[...] = jnp.where(x > 0, x, alpha * x)


def leaky_relu(x: jax.Array, alpha: float = 0.01) -> jax.Array:
    """LeakyReLU via a Pallas TPU kernel. Works for any shape / float dtype."""
    orig_shape = x.shape
    orig_dtype = x.dtype
    n = x.size
    if n == 0:
        return x

    lane = 128
    itemsize = jnp.dtype(orig_dtype).itemsize

    # --- Choose slab width C (multiple of 128). Prefer a width that divides n
    # so the wrapper is a pure reshape (no pad copy, no output slice copy).
    C = None
    for cand in (1024, 512, 256, 128):
        if n % cand == 0:
            C = cand
            break

    x_flat = jnp.reshape(x, (-1,))
    if C is None:
        # Remainder path (n not a multiple of 128): pad once to a lane multiple.
        C = lane
        n_pad = ((n + C - 1) // C) * C
        x_flat = jnp.pad(x_flat, (0, n_pad - n))
        padded = True
    else:
        n_pad = n
        padded = False

    rows = n_pad // C
    x2d = jnp.reshape(x_flat, (rows, C))

    # --- Row block from a ~4 MiB per-input-tile byte target.
    # (in + out) x double-buffering ~= 16 MiB of VMEM: safe on v5e/v6e/v7x.
    target_bytes = 4 * 1024 * 1024
    row_block = max(8, (target_bytes // (C * itemsize)) // 8 * 8)
    if row_block >= rows:
        # Block covers the full row extent -> legal (equals full array dim).
        row_block = rows
    grid = (pl.cdiv(rows, row_block),)

    kernel = functools.partial(_leaky_relu_kernel, alpha=alpha)

    out2d = pl.pallas_call(
        kernel,
        out_shape=jax.ShapeDtypeStruct((rows, C), orig_dtype),
        grid=grid,
        in_specs=[pl.BlockSpec((row_block, C), lambda i: (i, 0))],
        out_specs=pl.BlockSpec((row_block, C), lambda i: (i, 0)),
        compiler_params=pltpu.CompilerParams(
            dimension_semantics=("parallel",)
        ),
        cost_estimate=pl.CostEstimate(
            flops=2 * n,
            transcendentals=0,
            bytes_accessed=2 * n * itemsize,
        ),
    )(x2d)

    out_flat = jnp.reshape(out2d, (-1,))
    if padded:
        out_flat = out_flat[:n]
    return jnp.reshape(out_flat, orig_shape)


if __name__ == "__main__":
    key = jax.random.PRNGKey(0)
    alpha = 0.01

    # NCHW-like input, matching a typical conv activation map.
    x = jax.random.normal(key, (2, 4, 16, 16), dtype=jnp.float32)
    out = jax.block_until_ready(leaky_relu(x, alpha=alpha))
    ref = jnp.where(x > 0, x, alpha * x)
    assert out.shape == x.shape
    assert out.dtype == x.dtype
    assert jnp.allclose(out, ref, atol=0, rtol=0)

    # Also exercise the ragged / padded path (element count not a lane multiple).
    x2 = jax.random.normal(jax.random.PRNGKey(1), (3, 5, 7), dtype=jnp.float32)
    out2 = jax.block_until_ready(leaky_relu(x2, alpha=alpha))
    ref2 = jnp.where(x2 > 0, x2, alpha * x2)
    assert out2.shape == x2.shape
    assert jnp.allclose(out2, ref2, atol=0, rtol=0)

    print("KERNEL_OK")
</pallas_src>

<mosaic_0001>
module attributes {stable_mosaic.version = 11 : i64} {
  func.func @_leaky_relu_kernel(%arg0: i32, %arg1: memref<2x1024xf32, #tpu.memory_space<vmem>>, %arg2: memref<2x1024xf32, #tpu.memory_space<vmem>>) attributes {dimension_semantics = [#tpu.dimension_semantics<parallel>], iteration_bounds = array<i64: 1>, scalar_prefetch = 0 : i64, scratch_operands = 0 : i64, tpu.core_type = #tpu.core_type<tc>, window_params = [{transform_indices = @transform_0, window_bounds = array<i64: 2, 1024>}, {transform_indices = @transform_1, window_bounds = array<i64: 2, 1024>}]} {
    %c0 = arith.constant 0 : index
    %c0_0 = arith.constant 0 : index
    %0 = vector.load %arg1[%c0, %c0_0] : memref<2x1024xf32, #tpu.memory_space<vmem>>, vector<2x1024xf32>
    %cst = arith.constant 0.000000e+00 : f32
    %1 = vector.broadcast %cst : f32 to vector<2x1024xf32>
    %2 = arith.cmpf ogt, %0, %1 : vector<2x1024xf32>
    %cst_1 = arith.constant 0.00999999977 : f32
    %3 = vector.broadcast %cst_1 : f32 to vector<2x1024xf32>
    %4 = arith.mulf %3, %0 : vector<2x1024xf32>
    %5 = arith.select %2, %0, %4 : vector<2x1024xi1>, vector<2x1024xf32>
    %c0_2 = arith.constant 0 : index
    %c0_3 = arith.constant 0 : index
    %6 = vector.load %arg2[%c0_2, %c0_3] : memref<2x1024xf32, #tpu.memory_space<vmem>>, vector<2x1024xf32>
    tpu.vector_store %arg2[%c0_2, %c0_3], %5 {strides = array<i32>} : memref<2x1024xf32, #tpu.memory_space<vmem>>, vector<2x1024xf32>,
    return
  }
  func.func @transform_0(%arg0: i32) -> (i32, i32) {
    %c0_i32 = arith.constant 0 : i32
    %c0_i32_0 = arith.constant 0 : i32
    return %arg0, %c0_i32 : i32, i32
  }
  func.func @transform_1(%arg0: i32) -> (i32, i32) {
    %c0_i32 = arith.constant 0 : i32
    %c0_i32_0 = arith.constant 0 : i32
    return %arg0, %c0_i32 : i32, i32
  }
}

</mosaic_0001>

<llo_original>
// kernel: tpu_custom_call.1
$region0: #{tpu_custom_call.1}
  #allocation0 [shape = 'u32[]', space=smem, size = 0x4, offset = 0x4, fixed_abs, tag = 'smem constant byte address 0x4 - core index']
  #allocation1 [shape = 'u32[144,128]{1,0:T(1,128)}', space=vmem, size = 0x12000, scoped, tag = 'internal scratch']
  %s0 = inlined_call_operand.hbm [shape: f32[2,1024], index: 0, kind: input, shape index: {}]
  %s1 = inlined_call_operand.hbm [shape: f32[2,1024], index: 1, kind: output, shape index: {}]
  %s2 = sld [smem:[#allocation0]]
  $region18: #{tpu_custom_call.1} parent=0
    _
  %s4 = ssub.s32 1, %s2
  %s5 = scalar_select 0, %s4, %s2
  $region1: #{tpu_custom_call.1} parent=0
    #allocation2 [shape = 'u8[8192]{0}', space=vmem, size = 0x2000, scoped, tag = 'input window, operand 0, single buffered']
    #allocation3 [shape = 's32[1]{0}', space=sflag, size = 0x4, scoped, tag = 'scoped memory for tpu_custom_call.1']
    #allocation4 [shape = 's32[1]{0}', space=sflag, size = 0x4, scoped, tag = 'scoped memory for tpu_custom_call.1']
    #allocation5 [shape = 'u8[8192]{0}', space=vmem, size = 0x2000, scoped, tag = 'output window, operand 0, single buffered']
    %6 = vsyncpa [#allocation3], 0
    %7 = vsyncpa [#allocation4], 0
    // Predicated region
    $region2: #{tpu_custom_call.1} parent=1 // pred_check
      _
    $region3: #{tpu_custom_call.1} parent=1 // pred_check_branch
      %9 = sbr.rel (0) target = $region5
    $region4: #{tpu_custom_call.1} parent=1 // pred_region
      %s11 = ssub.s32 256, 256
      %12 = vsyncadd [#allocation3], %s11
      %s14 = sshll.u32 [#allocation2], 4
      %s15 = int_to_ptr.vmem [resolvable:$true] %s14
      %17 = dma.hbm_to_vmem [thread:$0]  %s0, 256, %s15, [#allocation3]
    $region5: #{tpu_custom_call.1} parent=1 // pred_fallthru
      _
    // Predicated region
    $region6: #{tpu_custom_call.1} parent=1 // pred_check
      _
    $region7: #{tpu_custom_call.1} parent=1 // pred_check_branch
      %19 = sbr.rel (0) target = $region9
    $region8: #{tpu_custom_call.1} parent=1 // pred_region
      %20 = dma.done [#allocation3], 256
    $region9: #{tpu_custom_call.1} parent=1 // pred_fallthru
      _
    %v21 = vld [vmem:[#allocation2] sm:$0xff]
    %v22 = vld [vmem:[#allocation2 + $0x8] sm:$0xff]
    %vm23 = vcmp.gt.f32.partialorder %v21, 0.0
    %vm24 = vcmp.gt.f32.partialorder %v22, 0.0
    %v25 = vmul.f32 %v21, 0.01
    %v26 = vmul.f32 %v22, 0.01
    %v27 = vsel %vm23, %v21, %v25
    %v28 = vsel %vm24, %v22, %v26
    %29 = vst [vmem:[#allocation5] sm:$0xff] %v27
    %30 = vst [vmem:[#allocation5 + $0x8] sm:$0xff] %v28
    // Predicated region
    $region10: #{tpu_custom_call.1} parent=1 // pred_check
      _
    $region11: #{tpu_custom_call.1} parent=1 // pred_check_branch
      %32 = sbr.rel (0) target = $region13
    $region12: #{tpu_custom_call.1} parent=1 // pred_region
      %s34 = ssub.s32 256, 256
      %35 = vsyncadd [#allocation4], %s34
      %s37 = sshll.u32 [#allocation5], 4
      %s38 = int_to_ptr.vmem [resolvable:$true] %s37
      %40 = dma.vmem_to_hbm [thread:$0]  %s38, 256, %s1, [#allocation4]
    $region13: #{tpu_custom_call.1} parent=1 // pred_fallthru
      _
    // Predicated region
    $region14: #{tpu_custom_call.1} parent=1 // pred_check
      _
    $region15: #{tpu_custom_call.1} parent=1 // pred_check_branch
      %42 = sbr.rel (0) target = $region17
    $region16: #{tpu_custom_call.1} parent=1 // pred_region
      %43 = dma.done [#allocation4], 256
    $region17: #{tpu_custom_call.1} parent=1 // pred_fallthru
      _
    %44 = vsyncpa [#allocation3], 1
    %45 = vsyncpa [#allocation4], 1

</llo_original>
